<compile_context>
chip_gen: v6e
topology: v6e:2x2x1
jax: 0.10.0
libtpu: 0.0.40
codegen_flags: <defaults>
</compile_context>

<pallas_src>
import jax
import jax.numpy as jnp
from jax import lax
from jax.experimental import pallas as pl
from jax.experimental.pallas import tpu as pltpu


def _pos_enc_kernel(time_ref, denom_ref, out_ref):
    # time_ref: (tB, 1) f32, denom_ref: (1, tD) f32, out_ref: (tB, tD) f32
    tB = out_ref.shape[0]
    t = time_ref[...]                       # (tB, 1)
    d = denom_ref[...]                      # (1, tD)
    emb = t * d                             # broadcast -> (tB, tD), f32

    # Global row parity (column vector, broadcasts along lanes in the select).
    row0 = pl.program_id(0) * tB
    local_row = lax.broadcasted_iota(jnp.int32, (tB, 1), 0)
    even_row = ((row0 + local_row) % 2) == 0            # (tB, 1) bool

    out_ref[...] = jnp.where(even_row, jnp.sin(emb), jnp.cos(emb)).astype(out_ref.dtype)


def _pick_tiles(B, D, max_tb=512, max_td=1024):
    # Row tile: full B if small, else 512 (multiple of 8 sublanes).
    # Col tile: full D if small, else 1024 (multiple of 128 lanes).
    # 512*1024*4B = 2 MiB per output buffer -> fits comfortably even on
    # v7x's 64 MiB VMEM / 32 MiB default scoped limit with double buffering.
    tB = B if B <= max_tb else max_tb
    tD = D if D <= max_td else max_td
    return tB, tD


def positional_encoding(time, denom):
    """time: (B,) float32, denom: (dim,) float32 -> (B, dim) float32."""
    B = time.shape[0]
    D = denom.shape[0]
    time2d = time.reshape(B, 1).astype(jnp.float32)
    denom2d = denom.reshape(1, D).astype(jnp.float32)

    tB, tD = _pick_tiles(B, D)
    grid = (pl.cdiv(B, tB), pl.cdiv(D, tD))

    return pl.pallas_call(
        _pos_enc_kernel,
        out_shape=jax.ShapeDtypeStruct((B, D), jnp.float32),
        grid=grid,
        in_specs=[
            pl.BlockSpec((tB, 1), lambda i, j: (i, 0)),   # time: tiled over B only
            pl.BlockSpec((1, tD), lambda i, j: (0, j)),   # denom: tiled over D only
        ],
        out_specs=pl.BlockSpec((tB, tD), lambda i, j: (i, j)),
        compiler_params=pltpu.CompilerParams(
            dimension_semantics=("parallel", "parallel"),
        ),
    )(time2d, denom2d)


def make_denom(dim):
    # denom = 10000 ** (2 * arange(dim) / dim), float32 (matches PyTorch promotion).
    ar = jnp.arange(dim, dtype=jnp.float32)
    return jnp.power(jnp.float32(10000.0), 2.0 * ar / jnp.float32(dim))


def reference(time, denom):
    emb = time[:, None] * denom[None, :]
    row = jnp.arange(time.shape[0])[:, None]
    return jnp.where(row % 2 == 0, jnp.sin(emb), jnp.cos(emb))


if __name__ == "__main__":
    key = jax.random.PRNGKey(0)
    k1, k2 = jax.random.split(key)

    # Small case consistent with the module's typical use (timestep embedding).
    dim = 32
    B = 8
    time = jax.random.uniform(k1, (B,), dtype=jnp.float32, minval=0.0, maxval=100.0)
    denom = make_denom(dim)

    out = jax.block_until_ready(positional_encoding(time, denom))
    ref = reference(time, denom)
    assert out.shape == (B, dim)
    assert out.dtype == jnp.float32
    assert jnp.allclose(out, ref, atol=1e-5, rtol=1e-5)

    # Larger case to exercise the tiled / multi-block path (grid (3, 1)).
    dim2 = 256
    B2 = 1536
    time2 = jax.random.uniform(k2, (B2,), dtype=jnp.float32, minval=0.0, maxval=100.0)
    denom2 = make_denom(dim2)

    out2 = jax.block_until_ready(positional_encoding(time2, denom2))
    ref2 = reference(time2, denom2)
    assert out2.shape == (B2, dim2)
    assert jnp.allclose(out2, ref2, atol=1e-5, rtol=1e-5)

    print("KERNEL_OK")
</pallas_src>

<mosaic_0001>
module attributes {stable_mosaic.version = 11 : i64} {
  func.func @_pos_enc_kernel(%arg0: i32, %arg1: i32, %arg2: memref<8x1xf32, #tpu.memory_space<vmem>>, %arg3: memref<1x32xf32, #tpu.memory_space<vmem>>, %arg4: memref<8x32xf32, #tpu.memory_space<vmem>>) attributes {dimension_semantics = [#tpu.dimension_semantics<parallel>, #tpu.dimension_semantics<parallel>], iteration_bounds = array<i64: 1, 1>, scalar_prefetch = 0 : i64, scratch_operands = 0 : i64, tpu.core_type = #tpu.core_type<tc>, window_params = [{transform_indices = @transform_0, window_bounds = array<i64: 8, 1>}, {transform_indices = @transform_1, window_bounds = array<i64: 1, 32>}, {transform_indices = @transform_2, window_bounds = array<i64: 8, 32>}]} {
    %c0 = arith.constant 0 : index
    %c0_0 = arith.constant 0 : index
    %0 = vector.load %arg2[%c0, %c0_0] : memref<8x1xf32, #tpu.memory_space<vmem>>, vector<8x1xf32>
    %c0_1 = arith.constant 0 : index
    %c0_2 = arith.constant 0 : index
    %1 = vector.load %arg3[%c0_1, %c0_2] : memref<1x32xf32, #tpu.memory_space<vmem>>, vector<1x32xf32>
    %2 = vector.broadcast %0 : vector<8x1xf32> to vector<8x32xf32>
    %3 = vector.broadcast %1 : vector<1x32xf32> to vector<8x32xf32>
    %4 = arith.mulf %2, %3 : vector<8x32xf32>
    %c8_i32 = arith.constant 8 : i32
    %5 = arith.muli %arg0, %c8_i32 : i32
    %6 = tpu.iota {dimensions = array<i32: 0>} : vector<8x1xi32>
    %7 = vector.broadcast %5 : i32 to vector<8x1xi32>
    %8 = arith.addi %7, %6 : vector<8x1xi32>
    %c2_i32 = arith.constant 2 : i32
    %c0_i32 = arith.constant 0 : i32
    %9 = arith.cmpi eq, %c2_i32, %c0_i32 : i32
    %c1_i32 = arith.constant 1 : i32
    %10 = arith.select %9, %c1_i32, %c2_i32 : i32
    %11 = vector.broadcast %10 : i32 to vector<8x1xi32>
    %12 = arith.remsi %8, %11 : vector<8x1xi32>
    %c0_i32_3 = arith.constant 0 : i32
    %13 = vector.broadcast %c0_i32_3 : i32 to vector<8x1xi32>
    %14 = arith.cmpi ne, %12, %13 : vector<8x1xi32>
    %c0_i32_4 = arith.constant 0 : i32
    %15 = vector.broadcast %c0_i32_4 : i32 to vector<8x1xi32>
    %16 = arith.cmpi slt, %12, %15 : vector<8x1xi32>
    %c0_i32_5 = arith.constant 0 : i32
    %17 = arith.cmpi slt, %10, %c0_i32_5 : i32
    %18 = vector.broadcast %17 : i1 to vector<8x1xi1>
    %19 = vector.broadcast %18 : vector<8x1xi1> to vector<8x1xi1>
    %20 = arith.xori %16, %19 : vector<8x1xi1>
    %21 = arith.andi %20, %14 : vector<8x1xi1>
    %22 = vector.broadcast %10 : i32 to vector<8x1xi32>
    %23 = arith.addi %12, %22 : vector<8x1xi32>
    %24 = arith.select %21, %23, %12 : vector<8x1xi1>, vector<8x1xi32>
    %c0_i32_6 = arith.constant 0 : i32
    %25 = vector.broadcast %c0_i32_6 : i32 to vector<8x1xi32>
    %26 = arith.cmpi eq, %24, %25 : vector<8x1xi32>
    %27 = math.sin %4 : vector<8x32xf32>
    %28 = math.cos %4 : vector<8x32xf32>
    %29 = vector.shape_cast %26 : vector<8x1xi1> to vector<8x1xi1>
    %30 = vector.broadcast %29 : vector<8x1xi1> to vector<8x32xi1>
    %31 = arith.select %30, %27, %28 : vector<8x32xi1>, vector<8x32xf32>
    %c0_7 = arith.constant 0 : index
    %c0_8 = arith.constant 0 : index
    %32 = vector.load %arg4[%c0_7, %c0_8] : memref<8x32xf32, #tpu.memory_space<vmem>>, vector<8x32xf32>
    tpu.vector_store %arg4[%c0_7, %c0_8], %31 {strides = array<i32>} : memref<8x32xf32, #tpu.memory_space<vmem>>, vector<8x32xf32>,
    return
  }
  func.func @transform_0(%arg0: i32, %arg1: i32) -> (i32, i32) {
    %c0_i32 = arith.constant 0 : i32
    %c0_i32_0 = arith.constant 0 : i32
    return %arg0, %c0_i32 : i32, i32
  }
  func.func @transform_1(%arg0: i32, %arg1: i32) -> (i32, i32) {
    %c0_i32 = arith.constant 0 : i32
    %c0_i32_0 = arith.constant 0 : i32
    return %c0_i32, %arg1 : i32, i32
  }
  func.func @transform_2(%arg0: i32, %arg1: i32) -> (i32, i32) {
    %c0_i32 = arith.constant 0 : i32
    return %arg0, %arg1 : i32, i32
  }
}

</mosaic_0001>

<llo_original>
// kernel: tpu_custom_call.1
$region0: #{tpu_custom_call.1}
  #allocation0 [shape = 'u32[]', space=smem, size = 0x4, offset = 0x4, fixed_abs, tag = 'smem constant byte address 0x4 - core index']
  #allocation1 [shape = 'u32[144,128]{1,0:T(1,128)}', space=vmem, size = 0x12000, scoped, tag = 'internal scratch']
  %s0 = inlined_call_operand.vmem [shape: f32[8,1], index: 0, kind: input, shape index: {}]
  %s1 = inlined_call_operand.vmem [shape: f32[1,32], index: 1, kind: input, shape index: {}]
  %s2 = inlined_call_operand.hbm [shape: f32[8,32], index: 2, kind: output, shape index: {}]
  %s3 = sld [smem:[#allocation0]]
  $region18: #{tpu_custom_call.1} parent=0
    _
  %s5 = ssub.s32 1, %s3
  %s6 = scalar_select 0, %s5, %s3
  $region1: #{tpu_custom_call.1} parent=0
    #allocation2 [shape = 'u8[4096]{0}', space=vmem, size = 0x1000, scoped, tag = 'output window, operand 0, single buffered']
    #allocation3 [shape = 's32[1]{0}', space=sflag, size = 0x4, scoped, tag = 'scoped memory for tpu_custom_call.1']
    %7 = vsyncpa [#allocation3], 0
    // Predicated region
    $region2: #{tpu_custom_call.1} parent=1 // pred_check
      _
    $region3: #{tpu_custom_call.1} parent=1 // pred_check_branch
      %9 = sbr.rel (0) target = $region5
    $region4: #{tpu_custom_call.1} parent=1 // pred_region
      _
    $region5: #{tpu_custom_call.1} parent=1 // pred_fallthru
      _
    // Predicated region
    $region6: #{tpu_custom_call.1} parent=1 // pred_check
      _
    $region7: #{tpu_custom_call.1} parent=1 // pred_check_branch
      %11 = sbr.rel (0) target = $region9
    $region8: #{tpu_custom_call.1} parent=1 // pred_region
      _
    $region9: #{tpu_custom_call.1} parent=1 // pred_fallthru
      _
    %v12 = vld [vmem:[%s0] sm:$0xff]
    %v13 = vld [vmem:[%s1] sm:$0x1]
    %15 = vset.pattern.permute.xlu0 0
    %16 = vperm.xlu0 %15, %v12
    %v17 = vpop.permute.xlu0 %16
    %v20 = vlaneseq
    %v21 = vshrl.u32 %v20, 7
    %v22 = vsub.s32 0, %v21
    %v23 = vrot.slane %v13, %v22
    %v25 = vmul.f32 %v17, %v23
    %s26 = smul.u32 0, 8
    %v27 = vlaneseq
    %v28 = vshrl.u32 %v27, 7
    %v29 = vstv %s26
    %v30 = vadd.s32 %v29, %v28
    %vm31 = vcmp.lt.s32.totalorder %v30, 0
    %v32 = vsub.s32 0, %v30
    %v33 = vsel %vm31, %v32, %v30
    %v34 = vshrl.u32 %v33, 1
    %v35 = vand.u32 %v33, 1
    %v36 = vsub.s32 0, %v35
    %v37 = vsel %vm31, %v36, %v35
    %vm38 = vcmp.ne.s32.totalorder %v37, 0
    %vm39 = vcmp.lt.s32.totalorder %v37, 0
    %vm40 = vmand %vm39, %vm38
    %v41 = vadd.s32 %v37, 2
    %v42 = vsel %vm40, %v41, %v37
    %vm43 = vcmp.eq.s32.totalorder %v42, 0
    %v44 = vand.u32 2147483647, %v25
    %vm45 = vcmp.le.f32.partialorder %v44, 0.7853982
    %vm46 = vcmp.lt.s32.totalorder %v25, 0
    %v47 = vand.u32 %v25, 2139095040
    %v48 = vshrl.u32 %v47, 23
    %v49 = vsub.s32 %v48, 127
    %v50 = vand.u32 2147483647, %v25
    %v51 = vand.u32 %v50, 8388607
    %v52 = vor.u32 %v51, 8388608
    %v53 = vsub.s32 0, %v52
    %v54 = vadd.s32 %v49, 1
    %vm55 = vcmp.gt.s32.totalorder %v54, 0
    %v56 = vsel %vm55, %v54, 0
    %v57 = vshrl.u32 %v56, 5
    %v58 = vand.u32 %v56, 31
    %v59 = vsub.s32 32, %v58
    %v60 = vshrl.u32 683565275, %v59
    %v61 = vshll.u32 683565275, %v58
    %v62 = vshrl.u32 2475754826, %v59
    %v63 = vor.u32 %v61, %v62
    %v64 = vshll.u32 2475754826, %v58
    %v65 = vshrl.u32 2131351028, %v59
    %v66 = vor.u32 %v64, %v65
    %v67 = vshll.u32 2131351028, %v58
    %v68 = vshrl.u32 2102212464, %v59
    %v69 = vor.u32 %v67, %v68
    %v70 = vshll.u32 2102212464, %v58
    %v71 = vshrl.u32 920167782, %v59
    %v72 = vor.u32 %v70, %v71
    %v73 = vshll.u32 920167782, %v58
    %v74 = vshrl.u32 1326507024, %v59
    %v75 = vor.u32 %v73, %v74
    %vm76 = vcmp.lt.s32.totalorder %v57, 1
    %vm77 = vcmp.lt.s32.totalorder %v57, 2
    %vm78 = vcmp.lt.s32.totalorder %v57, 3
    %vm79 = vcmp.lt.s32.totalorder %v57, 4
    %v80 = vsel %vm76, %v60, %v63
    %v81 = vsel %vm79, %v69, 2102212464
    %v82 = vsel %vm78, %v66, %v81
    %v83 = vsel %vm77, %v80, %v82
    %v84 = vsel %vm76, %v63, %v66
    %v85 = vsel %vm79, %v72, 920167782
    %v86 = vsel %vm78, %v69, %v85
    %v87 = vsel %vm77, %v84, %v86
    %v88 = vsel %vm76, %v66, %v69
    %v89 = vsel %vm79, %v75, 1326507024
    %v90 = vsel %vm78, %v72, %v89
    %v91 = vsel %vm77, %v88, %v90
    %v92 = vshll.u32 %v52, 8
    %v93 = vmul.u32.u64.compose %v92, %v91
    %v94 = vextract.low.u32 %v93
    %v95 = vextract.high.u32 %v93
    %v96 = vmul.u32.u64.compose %v92, %v87
    %v97 = vextract.low.u32 %v96
    %v98 = vextract.high.u32 %v96
    %v99 = vmul.u32 %v92, %v83
    %v100 = vadd.s32 %v95, %v97
    %vm101 = vc.u32 %v95, %v97
    %v102 = vadd.s32 %v98, 1
    %v103 = vsel %vm101, %v102, %v98
    %v104 = vadd.s32 %v99, %v103
    %v105 = vadd.s32 %v104, 536870912
    %v106 = vshrl.u32 %v105, 30
    %v107 = vshll.u32 %v106, 30
    %v108 = vsub.s32 %v104, %v107
    %vm109 = vcmp.lt.s32.totalorder %v108, 0
    %v110 = vsub.s32 0, %v108
    %v111 = vsel %vm109, %v110, %v108
    %v112 = vclz %v111
    %v113 = vsub.s32 %v112, 2
    %vm114 = vcmp.gt.s32.totalorder 0, %v113
    %v115 = vsel %vm114, 0, %v113
    %v116 = vsub.s32 32, %v115
    %v117 = vshll.u32 %v108, %v115
    %v118 = vshrl.u32 %v100, %v116
    %v119 = vor.u32 %v117, %v118
    %v120 = vsub.s32 4294967266, %v115
    %v121 = vadd.s32 %v120, 127
    %v122 = vshll.u32 %v121, 23
    %v123 = vor.u32 4788187, %v122
    %v124 = vand.u32 2147483647, %v123
    %v126 = vcvt.s32.f32 %v119
    %v127 = vmul.f32 %v126, %v124
    %v128 = vxor.u32 %v127, 2147483648
    %v129 = vsel %vm46, %v128, %v127
    %v130 = vsub.s32 4, %v106
    %v131 = vsel %vm46, %v130, %v106
    %v132 = vsel %vm45, %v25, %v129
    %v133 = vsel %vm45, 0, %v131
    %v134 = vcosq.f32.pop %v132
    %v135 = vsinq.f32.pop %v132
    %vm136 = vweird.f32 %v25
    %v137 = vadd.s32 %v133, 3
    %v138 = vand.u32 %v137, 3
    %vm139 = vcmp.lt.s32.totalorder %v138, 2
    %vm140 = vcmp.eq.s32.totalorder %v138, 0
    %v141 = vxor.u32 %v135, 2147483648
    %v142 = vsel %vm140, %v134, %v141
    %vm143 = vcmp.eq.s32.totalorder %v138, 2
    %v144 = vxor.u32 %v134, 2147483648
    %v145 = vsel %vm143, %v144, %v135
    %v146 = vsel %vm139, %v142, %v145
    %v147 = vsel %vm136, nan, %v146
    %v148 = vand.u32 2147483647, %v25
    %vm149 = vcmp.le.f32.partialorder %v148, 0.7853982
    %vm150 = vcmp.lt.s32.totalorder %v25, 0
    %v151 = vand.u32 %v25, 2139095040
    %v152 = vshrl.u32 %v151, 23
    %v153 = vsub.s32 %v152, 127
    %v154 = vand.u32 2147483647, %v25
    %v155 = vand.u32 %v154, 8388607
    %v156 = vor.u32 %v155, 8388608
    %v157 = vsub.s32 0, %v156
    %v158 = vadd.s32 %v153, 1
    %vm159 = vcmp.gt.s32.totalorder %v158, 0
    %v160 = vsel %vm159, %v158, 0
    %v161 = vshrl.u32 %v160, 5
    %v162 = vand.u32 %v160, 31
    %v163 = vsub.s32 32, %v162
    %v164 = vshrl.u32 683565275, %v163
    %v165 = vshll.u32 683565275, %v162
    %v166 = vshrl.u32 2475754826, %v163
    %v167 = vor.u32 %v165, %v166
    %v168 = vshll.u32 2475754826, %v162
    %v169 = vshrl.u32 2131351028, %v163
    %v170 = vor.u32 %v168, %v169
    %v171 = vshll.u32 2131351028, %v162
    %v172 = vshrl.u32 2102212464, %v163
    %v173 = vor.u32 %v171, %v172
    %v174 = vshll.u32 2102212464, %v162
    %v175 = vshrl.u32 920167782, %v163
    %v176 = vor.u32 %v174, %v175
    %v177 = vshll.u32 920167782, %v162
    %v178 = vshrl.u32 1326507024, %v163
    %v179 = vor.u32 %v177, %v178
    %vm180 = vcmp.lt.s32.totalorder %v161, 1
    %vm181 = vcmp.lt.s32.totalorder %v161, 2
    %vm182 = vcmp.lt.s32.totalorder %v161, 3
    %vm183 = vcmp.lt.s32.totalorder %v161, 4
    %v184 = vsel %vm180, %v164, %v167
    %v185 = vsel %vm183, %v173, 2102212464
    %v186 = vsel %vm182, %v170, %v185
    %v187 = vsel %vm181, %v184, %v186
    %v188 = vsel %vm180, %v167, %v170
    %v189 = vsel %vm183, %v176, 920167782
    %v190 = vsel %vm182, %v173, %v189
    %v191 = vsel %vm181, %v188, %v190
    %v192 = vsel %vm180, %v170, %v173
    %v193 = vsel %vm183, %v179, 1326507024
    %v194 = vsel %vm182, %v176, %v193
    %v195 = vsel %vm181, %v192, %v194
    %v196 = vshll.u32 %v156, 8
    %v197 = vmul.u32.u64.compose %v196, %v195
    %v198 = vextract.low.u32 %v197
    %v199 = vextract.high.u32 %v197
    %v200 = vmul.u32.u64.compose %v196, %v191
    %v201 = vextract.low.u32 %v200
    %v202 = vextract.high.u32 %v200
    %v203 = vmul.u32 %v196, %v187
    %v204 = vadd.s32 %v199, %v201
    %vm205 = vc.u32 %v199, %v201
    %v206 = vadd.s32 %v202, 1
    %v207 = vsel %vm205, %v206, %v202
    %v208 = vadd.s32 %v203, %v207
    %v209 = vadd.s32 %v208, 536870912
    %v210 = vshrl.u32 %v209, 30
    %v211 = vshll.u32 %v210, 30
    %v212 = vsub.s32 %v208, %v211
    %vm213 = vcmp.lt.s32.totalorder %v212, 0
    %v214 = vsub.s32 0, %v212
    %v215 = vsel %vm213, %v214, %v212
    %v216 = vclz %v215
    %v217 = vsub.s32 %v216, 2
    %vm218 = vcmp.gt.s32.totalorder 0, %v217
    %v219 = vsel %vm218, 0, %v217
    %v220 = vsub.s32 32, %v219
    %v221 = vshll.u32 %v212, %v219
    %v222 = vshrl.u32 %v204, %v220
    %v223 = vor.u32 %v221, %v222
    %v224 = vsub.s32 4294967266, %v219
    %v225 = vadd.s32 %v224, 127
    %v226 = vshll.u32 %v225, 23
    %v227 = vor.u32 4788187, %v226
    %v228 = vand.u32 2147483647, %v227
    %v230 = vcvt.s32.f32 %v223
    %v231 = vmul.f32 %v230, %v228
    %v232 = vxor.u32 %v231, 2147483648
    %v233 = vsel %vm150, %v232, %v231
    %v234 = vsub.s32 4, %v210
    %v235 = vsel %vm150, %v234, %v210
    %v236 = vsel %vm149, %v25, %v233
    %v237 = vsel %vm149, 0, %v235
    %v238 = vcosq.f32.pop %v236
    %v239 = vsinq.f32.pop %v236
    %vm240 = vweird.f32 %v25
    %v241 = vand.u32 %v237, 3
    %vm242 = vcmp.lt.s32.totalorder %v241, 2
    %vm243 = vcmp.eq.s32.totalorder %v241, 0
    %v244 = vxor.u32 %v239, 2147483648
    %v245 = vsel %vm243, %v238, %v244
    %vm246 = vcmp.eq.s32.totalorder %v241, 2
    %v247 = vxor.u32 %v238, 2147483648
    %v248 = vsel %vm246, %v247, %v239
    %v249 = vsel %vm242, %v245, %v248
    %v250 = vsel %vm240, nan, %v249
    %v251 = vsel %vm43, 1, 0
    %vm252 = vcmp.eq.s32.totalorder %v251, 1
    %v253 = vsel %vm252, %v147, %v250
    %vm254 = vcmask 261120
    %255 = vst.msk [vmem:[#allocation2] sm:$0xff] %vm254, %v253
    // Predicated region
    $region10: #{tpu_custom_call.1} parent=1 // pred_check
      _
    $region11: #{tpu_custom_call.1} parent=1 // pred_check_branch
      %257 = sbr.rel (0) target = $region13
    $region12: #{tpu_custom_call.1} parent=1 // pred_region
      %s259 = ssub.s32 128, 128
      %260 = vsyncadd [#allocation3], %s259
      %s262 = sshll.u32 [#allocation2], 4
      %s263 = int_to_ptr.vmem [resolvable:$true] %s262
      %265 = dma.vmem_to_hbm [thread:$0]  %s263, 128, %s2, [#allocation3]
    $region13: #{tpu_custom_call.1} parent=1 // pred_fallthru
      _
    // Predicated region
    $region14: #{tpu_custom_call.1} parent=1 // pred_check
      _
    $region15: #{tpu_custom_call.1} parent=1 // pred_check_branch
      %267 = sbr.rel (0) target = $region17
    $region16: #{tpu_custom_call.1} parent=1 // pred_region
      %268 = dma.done [#allocation3], 128
    $region17: #{tpu_custom_call.1} parent=1 // pred_fallthru
      _
    %269 = vsyncpa [#allocation3], 1

</llo_original>
